<compile_context>
chip_gen: v7x
topology: tpu7x:2x2x1
jax: 0.10.0
libtpu: 0.0.40
codegen_flags: <defaults>
</compile_context>

<pallas_src>
import math

import jax
import jax.numpy as jnp
from jax.experimental import pallas as pl
from jax.experimental.pallas import tpu as pltpu

_INV_SQRT2 = 1.0 / math.sqrt(2.0)


def _round_up(v, m):
    return ((v + m - 1) // m) * m


def _cdiv(a, b):
    return (a + b - 1) // b


def _gelu_erf(x):
    # nn.GELU() default = exact erf formulation, kept in f32 for parity.
    # TODO(synk): on v5e (no bf16 EUP) the erf polynomial can bind the VALU;
    # switch to the tanh approximation there if strict parity is not needed.
    return 0.5 * x * (1.0 + jax.lax.erf(x * _INV_SQRT2))


# ----------------------------- kernels --------------------------------------


def _proj_resident_kernel(x_ref, w1_ref, b1_ref, w2_ref, b2_ref, o_ref):
    """Both weights VMEM-resident; grid = (num_m,)."""
    x = x_ref[...].astype(jnp.bfloat16)
    h = jnp.dot(x, w1_ref[...], preferred_element_type=jnp.float32)
    h = h + b1_ref[...].astype(jnp.float32)
    h = _gelu_erf(h)
    o = jnp.dot(h.astype(jnp.bfloat16), w2_ref[...],
                preferred_element_type=jnp.float32)
    o = o + b2_ref[...].astype(jnp.float32)
    o_ref[...] = o.astype(o_ref.dtype)


def _proj_tiled_kernel(x_ref, w1_ref, b1_ref, w2_ref, b2_ref, o_ref, h_ref):
    """w2 tiled along its output dim; grid = (num_m, num_n).

    h = GELU(x @ W1 + b1) is computed once per M tile (at n == 0) and cached
    in a VMEM scratch, then reused across all n.  This is ONLY correct because
    the N axis is "arbitrary" (sequential, innermost, same core per M tile);
    do not mark it "parallel" or reorder the grid.
    """
    @pl.when(pl.program_id(1) == 0)
    def _():
        x = x_ref[...].astype(jnp.bfloat16)
        acc = jnp.dot(x, w1_ref[...], preferred_element_type=jnp.float32)
        acc = acc + b1_ref[...].astype(jnp.float32)
        h_ref[...] = _gelu_erf(acc).astype(h_ref.dtype)

    o = jnp.dot(h_ref[...], w2_ref[...], preferred_element_type=jnp.float32)
    o = o + b2_ref[...].astype(jnp.float32)
    o_ref[...] = o.astype(o_ref.dtype)


# ----------------------------- wrapper --------------------------------------


def _vmem_capacity_bytes():
    try:
        return int(pltpu.get_tpu_info().vmem_capacity_bytes)
    except Exception:
        return 64 << 20  # conservative: v7x per-TensorCore VMEM


def _pick_tile_m(M):
    if M <= 256:
        return min(256, _round_up(M, 8))
    # Guarantee >= 2 M tiles so the "parallel" axis spans both TensorCores on
    # v7x (a single extra grid step is negligible on single-TC chips), and
    # raise the tile to 512 for large M so the second GEMM stays MXU-bound.
    return min(512, _round_up(_cdiv(M, 2), 256))


def _projection_pallas_impl(x2d, w1, b1, w2, b2, tuned_pipeline):
    """x2d: (M, D); w1: (D, H) bf16; b1: (1, H) f32; w2: (H, H) bf16; b2: (1, H) f32."""
    M, D = x2d.shape
    H = w1.shape[1]
    bf16, f32 = 2, 4
    xb = x2d.dtype.itemsize
    ob = x2d.dtype.itemsize  # output keeps the input dtype

    vmem_cap = _vmem_capacity_bytes()
    budget = int(vmem_cap * 0.85)  # headroom for compiler-internal scratch

    tile_m = _pick_tile_m(M)
    w_bufs = 1 if tuned_pipeline else 2      # constant-index weight blocks
    w2_bufs = 3 if tuned_pipeline else 2     # streamed w2 tiles (tiled path)

    def resident_need(tm):
        return (2 * tm * D * xb + 2 * tm * H * ob
                + w_bufs * (D * H + H * H) * bf16
                + 2 * w_bufs * H * f32)

    def tiled_need(tm, tn):
        return (2 * tm * D * xb + 2 * tm * tn * ob
                + w_bufs * (D * H * bf16 + H * f32)
                + w2_bufs * (H * tn * bf16 + tn * f32)
                + tm * H * bf16)

    use_resident = resident_need(tile_m) <= budget

    if use_resident:
        num_m = _cdiv(M, tile_m)
        grid = (num_m,)
        w_mode = dict(pipeline_mode=pl.Buffered(1)) if tuned_pipeline else {}
        in_specs = [
            pl.BlockSpec((tile_m, D), lambda m: (m, 0)),            # x
            pl.BlockSpec((D, H), lambda m: (0, 0), **w_mode),       # w1 resident
            pl.BlockSpec((1, H), lambda m: (0, 0), **w_mode),       # b1
            pl.BlockSpec((H, H), lambda m: (0, 0), **w_mode),       # w2 resident
            pl.BlockSpec((1, H), lambda m: (0, 0), **w_mode),       # b2
        ]
        out_specs = pl.BlockSpec((tile_m, H), lambda m: (m, 0))
        scratch = []
        kernel = _proj_resident_kernel
        dims = ("parallel",)
        need = resident_need(tile_m)
        w2_hbm_reads = 1
    else:
        tile_n = H if H <= 512 else 512
        while tiled_need(tile_m, tile_n) > budget and tile_n > 128:
            tile_n //= 2
        while tiled_need(tile_m, tile_n) > budget and tile_m > 256:
            tile_m //= 2
        num_m = _cdiv(M, tile_m)
        num_n = _cdiv(H, tile_n)
        grid = (num_m, num_n)
        w1_mode = dict(pipeline_mode=pl.Buffered(1)) if tuned_pipeline else {}
        w2_mode = dict(pipeline_mode=pl.Buffered(3)) if tuned_pipeline else {}
        in_specs = [
            pl.BlockSpec((tile_m, D), lambda m, n: (m, 0)),               # x
            pl.BlockSpec((D, H), lambda m, n: (0, 0), **w1_mode),         # w1 resident
            pl.BlockSpec((1, H), lambda m, n: (0, 0), **w1_mode),         # b1
            pl.BlockSpec((H, tile_n), lambda m, n: (0, n), **w2_mode),    # w2 tile
            pl.BlockSpec((1, tile_n), lambda m, n: (0, n), **w2_mode),    # b2 tile
        ]
        out_specs = pl.BlockSpec((tile_m, tile_n), lambda m, n: (m, n))
        scratch = [pltpu.VMEM((tile_m, H), jnp.bfloat16)]
        kernel = _proj_tiled_kernel
        dims = ("parallel", "arbitrary")
        need = tiled_need(tile_m, tile_n)
        w2_hbm_reads = num_m  # w2 is re-streamed once per M tile

    vmem_limit = int(min(max(need + (16 << 20), 32 << 20),
                         int(vmem_cap * 0.9)))

    cost = pl.CostEstimate(
        flops=2 * M * (D * H + H * H),
        transcendentals=M * H,
        bytes_accessed=(M * D * xb
                        + D * H * bf16
                        + w2_hbm_reads * H * H * bf16
                        + 2 * H * f32
                        + M * H * ob),
    )

    return pl.pallas_call(
        kernel,
        out_shape=jax.ShapeDtypeStruct((M, H), x2d.dtype),
        grid_spec=pltpu.PrefetchScalarGridSpec(
            num_scalar_prefetch=0,
            grid=grid,
            in_specs=in_specs,
            out_specs=out_specs,
            scratch_shapes=scratch),
        compiler_params=pltpu.CompilerParams(
            dimension_semantics=dims,
            vmem_limit_bytes=vmem_limit),
        cost_estimate=cost,
    )(x2d, w1, b1, w2, b2)


def projection_pallas(x2d, w1, b1, w2, b2):
    """Fused Linear -> GELU(erf) -> Linear over the last dim of x2d (M, D)."""
    try:
        return _projection_pallas_impl(x2d, w1, b1, w2, b2,
                                       tuned_pipeline=True)
    except Exception:
        # Fallback without pipeline_mode tuning (double-buffered defaults),
        # in case pl.Buffered(...) is not accepted by the local jax build.
        return _projection_pallas_impl(x2d, w1, b1, w2, b2,
                                       tuned_pipeline=False)


# ----------------------------- module wrapper -------------------------------


class GatedBlock0Pallas:
    """Mirrors GatedBlock0.forward for the (non-576) projection path."""

    def __init__(self, mm_hidden_size, hidden_size, mm_learnable_gated=-1,
                 key=None):
        self.target_sequence_length = 576
        self.learnable_gated = mm_learnable_gated
        self.k = 2
        self.num_experts = 2
        if key is None:
            key = jax.random.PRNGKey(0)
        k1, k2 = jax.random.split(key, 2)
        # projection = Linear(mm_hidden, hidden) -> GELU -> Linear(hidden, hidden)
        # Weights stored transposed to (in, out) vs nn.Linear, as bf16 MXU operands.
        self.w1 = (jax.random.normal(k1, (mm_hidden_size, hidden_size),
                                     jnp.float32) * 0.02).astype(jnp.bfloat16)
        self.b1 = jnp.zeros((1, hidden_size), jnp.float32)
        self.w2 = (jax.random.normal(k2, (hidden_size, hidden_size),
                                     jnp.float32) * 0.02).astype(jnp.bfloat16)
        self.b2 = jnp.zeros((1, hidden_size), jnp.float32)
        # Gating params exist in the module (zeros, bf16); kept for parity.
        self.w_gate = jnp.zeros((mm_hidden_size, self.num_experts), jnp.bfloat16)
        self.w_noise = jnp.zeros((mm_hidden_size, self.num_experts), jnp.bfloat16)

    def _projection(self, x):
        orig_shape = x.shape
        x2d = x.reshape(-1, orig_shape[-1])
        out = projection_pallas(x2d, self.w1, self.b1, self.w2, self.b2)
        return out.reshape(*orig_shape[:-1], out.shape[-1])

    def __call__(self, x, text_embedding=None, attn_mask=None):
        if (x.shape[0] != self.target_sequence_length
                and x.shape[1] != self.target_sequence_length):
            return self._projection(x)
        # TODO(synk): 576-token gated MoE path requires the undefined Resampler.
        raise NotImplementedError(
            "gated MoE path requires external Resampler definition")


def _reference_projection(x2d, w1, b1, w2, b2):
    # Same bf16-operand / f32-accumulate math as the kernel.
    h = jnp.dot(x2d.astype(jnp.bfloat16), w1,
                preferred_element_type=jnp.float32) + b1
    h = _gelu_erf(h)
    return jnp.dot(h.astype(jnp.bfloat16), w2,
                   preferred_element_type=jnp.float32) + b2


if __name__ == "__main__":
    key = jax.random.PRNGKey(0)
    kx, kp = jax.random.split(key)

    # Small shapes consistent with the module: (batch, seq, mm_hidden).
    N, C = 2, 8                 # seq != 576 -> projection path
    mm_hidden_size = 256
    hidden_size = 128

    x = jax.random.normal(kx, (N, C, mm_hidden_size), jnp.float32)

    block = GatedBlock0Pallas(mm_hidden_size, hidden_size,
                              mm_learnable_gated=-1, key=kp)
    out = jax.block_until_ready(block(x))

    assert out.shape == (N, C, hidden_size), out.shape

    ref = _reference_projection(x.reshape(-1, mm_hidden_size),
                                block.w1, block.b1, block.w2, block.b2)
    ref = ref.reshape(N, C, hidden_size)
    max_err = float(jnp.max(jnp.abs(out - ref)))
    assert jnp.allclose(out, ref, atol=1e-2, rtol=1e-2), max_err

    print("KERNEL_OK")
</pallas_src>

<mosaic_0001>
module attributes {stable_mosaic.version = 11 : i64} {
  func.func @_proj_resident_kernel(%arg0: i32, %arg1: memref<16x256xf32, #tpu.memory_space<vmem>>, %arg2: memref<256x128xbf16, #tpu.memory_space<vmem>>, %arg3: memref<1x128xf32, #tpu.memory_space<vmem>>, %arg4: memref<128x128xbf16, #tpu.memory_space<vmem>>, %arg5: memref<1x128xf32, #tpu.memory_space<vmem>>, %arg6: memref<16x128xf32, #tpu.memory_space<vmem>>) attributes {dimension_semantics = [#tpu.dimension_semantics<parallel>], iteration_bounds = array<i64: 1>, scalar_prefetch = 0 : i64, scratch_operands = 0 : i64, tpu.core_type = #tpu.core_type<tc>, window_params = [{transform_indices = @transform_0, window_bounds = array<i64: 16, 256>}, {pipeline_mode = #tpu.pipeline_mode<synchronous>, transform_indices = @transform_1, window_bounds = array<i64: 256, 128>}, {pipeline_mode = #tpu.pipeline_mode<synchronous>, transform_indices = @transform_2, window_bounds = array<i64: 1, 128>}, {pipeline_mode = #tpu.pipeline_mode<synchronous>, transform_indices = @transform_3, window_bounds = array<i64: 128, 128>}, {pipeline_mode = #tpu.pipeline_mode<synchronous>, transform_indices = @transform_4, window_bounds = array<i64: 1, 128>}, {transform_indices = @transform_5, window_bounds = array<i64: 16, 128>}]} {
    %c0 = arith.constant 0 : index
    %c0_0 = arith.constant 0 : index
    %0 = vector.load %arg1[%c0, %c0_0] : memref<16x256xf32, #tpu.memory_space<vmem>>, vector<16x256xf32>
    %1 = arith.truncf %0 : vector<16x256xf32> to vector<16x256xbf16>
    %c0_1 = arith.constant 0 : index
    %c0_2 = arith.constant 0 : index
    %2 = vector.load %arg2[%c0_1, %c0_2] : memref<256x128xbf16, #tpu.memory_space<vmem>>, vector<256x128xbf16>
    %cst = arith.constant dense<0.000000e+00> : vector<16x128xf32>
    %3 = tpu.matmul %1, %2, %cst {dimension_numbers = #tpu.dot_dimension_numbers<[1], [0], [0], [1], [0, 0, 1, 1], [], []>} : vector<16x256xbf16>, vector<256x128xbf16>, vector<16x128xf32> -> vector<16x128xf32>
    %c0_3 = arith.constant 0 : index
    %c0_4 = arith.constant 0 : index
    %4 = vector.load %arg3[%c0_3, %c0_4] : memref<1x128xf32, #tpu.memory_space<vmem>>, vector<1x128xf32>
    %5 = vector.broadcast %4 : vector<1x128xf32> to vector<16x128xf32>
    %6 = arith.addf %3, %5 : vector<16x128xf32>
    %cst_5 = arith.constant 5.000000e-01 : f32
    %7 = vector.broadcast %cst_5 : f32 to vector<16x128xf32>
    %8 = arith.mulf %7, %6 : vector<16x128xf32>
    %cst_6 = arith.constant 0.707106769 : f32
    %9 = vector.broadcast %cst_6 : f32 to vector<16x128xf32>
    %10 = arith.mulf %6, %9 : vector<16x128xf32>
    %11 = math.erf %10 : vector<16x128xf32>
    %cst_7 = arith.constant 1.000000e+00 : f32
    %12 = vector.broadcast %cst_7 : f32 to vector<16x128xf32>
    %13 = arith.addf %12, %11 : vector<16x128xf32>
    %14 = arith.mulf %8, %13 : vector<16x128xf32>
    %15 = arith.truncf %14 : vector<16x128xf32> to vector<16x128xbf16>
    %c0_8 = arith.constant 0 : index
    %c0_9 = arith.constant 0 : index
    %16 = vector.load %arg4[%c0_8, %c0_9] : memref<128x128xbf16, #tpu.memory_space<vmem>>, vector<128x128xbf16>
    %cst_10 = arith.constant dense<0.000000e+00> : vector<16x128xf32>
    %17 = tpu.matmul %15, %16, %cst_10 {dimension_numbers = #tpu.dot_dimension_numbers<[1], [0], [0], [1], [0, 0, 1, 1], [], []>} : vector<16x128xbf16>, vector<128x128xbf16>, vector<16x128xf32> -> vector<16x128xf32>
    %c0_11 = arith.constant 0 : index
    %c0_12 = arith.constant 0 : index
    %18 = vector.load %arg5[%c0_11, %c0_12] : memref<1x128xf32, #tpu.memory_space<vmem>>, vector<1x128xf32>
    %19 = vector.broadcast %18 : vector<1x128xf32> to vector<16x128xf32>
    %20 = arith.addf %17, %19 : vector<16x128xf32>
    %c0_13 = arith.constant 0 : index
    %c0_14 = arith.constant 0 : index
    %21 = vector.load %arg6[%c0_13, %c0_14] : memref<16x128xf32, #tpu.memory_space<vmem>>, vector<16x128xf32>
    tpu.vector_store %arg6[%c0_13, %c0_14], %20 {strides = array<i32>} : memref<16x128xf32, #tpu.memory_space<vmem>>, vector<16x128xf32>,
    return
  }
  func.func @transform_0(%arg0: i32) -> (i32, i32) {
    %c0_i32 = arith.constant 0 : i32
    %c0_i32_0 = arith.constant 0 : i32
    return %arg0, %c0_i32 : i32, i32
  }
  func.func @transform_1(%arg0: i32) -> (i32, i32) {
    %c0_i32 = arith.constant 0 : i32
    %c0_i32_0 = arith.constant 0 : i32
    %c0_i32_1 = arith.constant 0 : i32
    return %c0_i32, %c0_i32_0 : i32, i32
  }
  func.func @transform_2(%arg0: i32) -> (i32, i32) {
    %c0_i32 = arith.constant 0 : i32
    %c0_i32_0 = arith.constant 0 : i32
    %c0_i32_1 = arith.constant 0 : i32
    return %c0_i32, %c0_i32_0 : i32, i32
  }
  func.func @transform_3(%arg0: i32) -> (i32, i32) {
    %c0_i32 = arith.constant 0 : i32
    %c0_i32_0 = arith.constant 0 : i32
    %c0_i32_1 = arith.constant 0 : i32
    return %c0_i32, %c0_i32_0 : i32, i32
  }
  func.func @transform_4(%arg0: i32) -> (i32, i32) {
    %c0_i32 = arith.constant 0 : i32
    %c0_i32_0 = arith.constant 0 : i32
    %c0_i32_1 = arith.constant 0 : i32
    return %c0_i32, %c0_i32_0 : i32, i32
  }
  func.func @transform_5(%arg0: i32) -> (i32, i32) {
    %c0_i32 = arith.constant 0 : i32
    %c0_i32_0 = arith.constant 0 : i32
    return %arg0, %c0_i32 : i32, i32
  }
}

module attributes {stable_mosaic.version = 11 : i64} {
  func.func @_proj_resident_kernel(%arg0: i32, %arg1: memref<16x256xf32, #tpu.memory_space<vmem>>, %arg2: memref<256x128xbf16, #tpu.memory_space<vmem>>, %arg3: memref<1x128xf32, #tpu.memory_space<vmem>>, %arg4: memref<128x128xbf16, #tpu.memory_space<vmem>>, %arg5: memref<1x128xf32, #tpu.memory_space<vmem>>, %arg6: memref<16x128xf32, #tpu.memory_space<vmem>>) attributes {dimension_semantics = [#tpu.dimension_semantics<parallel>], iteration_bounds = array<i64: 1>, scalar_prefetch = 0 : i64, scratch_operands = 0 : i64, tpu.core_type = #tpu.core_type<tc>, window_params = [{transform_indices = @transform_0, window_bounds = array<i64: 16, 256>}, {pipeline_mode = #tpu.pipeline_mode<synchronous>, transform_indices = @transform_1, window_bounds = array<i64: 256, 128>}, {pipeline_mode = #tpu.pipeline_mode<synchronous>, transform_indices = @transform_2, window_bounds = array<i64: 1, 128>}, {pipeline_mode = #tpu.pipeline_mode<synchronous>, transform_indices = @transform_3, window_bounds = array<i64: 128, 128>}, {pipeline_mode = #tpu.pipeline_mode<synchronous>, transform_indices = @transform_4, window_bounds = array<i64: 1, 128>}, {transform_indices = @transform_5, window_bounds = array<i64: 16, 128>}]} {
    %c0 = arith.constant 0 : index
    %c0_0 = arith.constant 0 : index
    %0 = vector.load %arg1[%c0, %c0_0] : memref<16x256xf32, #tpu.memory_space<vmem>>, vector<16x256xf32>
    %1 = arith.truncf %0 : vector<16x256xf32> to vector<16x256xbf16>
    %c0_1 = arith.constant 0 : index
    %c0_2 = arith.constant 0 : index
    %2 = vector.load %arg2[%c0_1, %c0_2] : memref<256x128xbf16, #tpu.memory_space<vmem>>, vector<256x128xbf16>
    %cst = arith.constant dense<0.000000e+00> : vector<16x128xf32>
    %3 = tpu.matmul %1, %2, %cst {dimension_numbers = #tpu.dot_dimension_numbers<[1], [0], [0], [1], [0, 0, 1, 1], [], []>} : vector<16x256xbf16>, vector<256x128xbf16>, vector<16x128xf32> -> vector<16x128xf32>
    %c0_3 = arith.constant 0 : index
    %c0_4 = arith.constant 0 : index
    %4 = vector.load %arg3[%c0_3, %c0_4] : memref<1x128xf32, #tpu.memory_space<vmem>>, vector<1x128xf32>
    %5 = vector.broadcast %4 : vector<1x128xf32> to vector<16x128xf32>
    %6 = arith.addf %3, %5 : vector<16x128xf32>
    %cst_5 = arith.constant 5.000000e-01 : f32
    %7 = vector.broadcast %cst_5 : f32 to vector<16x128xf32>
    %8 = arith.mulf %7, %6 : vector<16x128xf32>
    %cst_6 = arith.constant 0.707106769 : f32
    %9 = vector.broadcast %cst_6 : f32 to vector<16x128xf32>
    %10 = arith.mulf %6, %9 : vector<16x128xf32>
    %11 = math.erf %10 : vector<16x128xf32>
    %cst_7 = arith.constant 1.000000e+00 : f32
    %12 = vector.broadcast %cst_7 : f32 to vector<16x128xf32>
    %13 = arith.addf %12, %11 : vector<16x128xf32>
    %14 = arith.mulf %8, %13 : vector<16x128xf32>
    %15 = arith.truncf %14 : vector<16x128xf32> to vector<16x128xbf16>
    %c0_8 = arith.constant 0 : index
    %c0_9 = arith.constant 0 : index
    %16 = vector.load %arg4[%c0_8, %c0_9] : memref<128x128xbf16, #tpu.memory_space<vmem>>, vector<128x128xbf16>
    %cst_10 = arith.constant dense<0.000000e+00> : vector<16x128xf32>
    %17 = tpu.matmul %15, %16, %cst_10 {dimension_numbers = #tpu.dot_dimension_numbers<[1], [0], [0], [1], [0, 0, 1, 1], [], []>} : vector<16x128xbf16>, vector<128x128xbf16>, vector<16x128xf32> -> vector<16x128xf32>
    %c0_11 = arith.constant 0 : index
    %c0_12 = arith.constant 0 : index
    %18 = vector.load %arg5[%c0_11, %c0_12] : memref<1x128xf32, #tpu.memory_space<vmem>>, vector<1x128xf32>
    %19 = vector.broadcast %18 : vector<1x128xf32> to vector<16x128xf32>
    %20 = arith.addf %17, %19 : vector<16x128xf32>
    %c0_13 = arith.constant 0 : index
    %c0_14 = arith.constant 0 : index
    %21 = vector.load %arg6[%c0_13, %c0_14] : memref<16x128xf32, #tpu.memory_space<vmem>>, vector<16x128xf32>
    tpu.vector_store %arg6[%c0_13, %c0_14], %20 {strides = array<i32>} : memref<16x128xf32, #tpu.memory_space<vmem>>, vector<16x128xf32>,
    return
  }
  func.func @transform_0(%arg0: i32) -> (i32, i32) {
    %c0_i32 = arith.constant 0 : i32
    %c0_i32_0 = arith.constant 0 : i32
    return %arg0, %c0_i32 : i32, i32
  }
  func.func @transform_1(%arg0: i32) -> (i32, i32) {
    %c0_i32 = arith.constant 0 : i32
    %c0_i32_0 = arith.constant 0 : i32
    %c0_i32_1 = arith.constant 0 : i32
    return %c0_i32, %c0_i32_0 : i32, i32
  }
  func.func @transform_2(%arg0: i32) -> (i32, i32) {
    %c0_i32 = arith.constant 0 : i32
    %c0_i32_0 = arith.constant 0 : i32
    %c0_i32_1 = arith.constant 0 : i32
    return %c0_i32, %c0_i32_0 : i32, i32
  }
  func.func @transform_3(%arg0: i32) -> (i32, i32) {
    %c0_i32 = arith.constant 0 : i32
    %c0_i32_0 = arith.constant 0 : i32
    %c0_i32_1 = arith.constant 0 : i32
    return %c0_i32, %c0_i32_0 : i32, i32
  }
  func.func @transform_4(%arg0: i32) -> (i32, i32) {
    %c0_i32 = arith.constant 0 : i32
    %c0_i32_0 = arith.constant 0 : i32
    %c0_i32_1 = arith.constant 0 : i32
    return %c0_i32, %c0_i32_0 : i32, i32
  }
  func.func @transform_5(%arg0: i32) -> (i32, i32) {
    %c0_i32 = arith.constant 0 : i32
    %c0_i32_0 = arith.constant 0 : i32
    return %arg0, %c0_i32 : i32, i32
  }
}

</mosaic_0001>

<llo_original>
// kernel: tpu_custom_call.1
$region0: #{tpu_custom_call.1}
  #allocation0 [shape = 'u32[]', space=smem, size = 0x4, offset = 0x4, fixed_abs, tag = 'smem constant byte address 0x4 - core index']
  #allocation1 [shape = 'u32[144,128]{1,0:T(1,128)}', space=vmem, size = 0x12000, scoped, tag = 'internal scratch']
  %s0 = inlined_call_operand.hbm [shape: f32[16,256], index: 0, kind: input, shape index: {}]
  %s1 = inlined_call_operand.hbm [shape: bf16[256,128], index: 1, kind: input, shape index: {}]
  %s2 = inlined_call_operand.vmem [shape: f32[1,128], index: 2, kind: input, shape index: {}]
  %s3 = inlined_call_operand.hbm [shape: bf16[128,128], index: 3, kind: input, shape index: {}]
  %s4 = inlined_call_operand.vmem [shape: f32[1,128], index: 4, kind: input, shape index: {}]
  %s5 = inlined_call_operand.hbm [shape: f32[16,128], index: 5, kind: output, shape index: {}]
  %s6 = sld [smem:[#allocation0]]
  $region42: #{tpu_custom_call.1} parent=0
    _
  %s8 = ssub.s32 1, %s6
  %s9 = scalar_select 0, %s8, %s6
  $region1: #{tpu_custom_call.1} parent=0
    #allocation2 [shape = 'u8[16384]{0}', space=vmem, size = 0x4000, scoped, tag = 'input window, operand 0, single buffered']
    #allocation3 [shape = 's32[1]{0}', space=sflag, size = 0x4, scoped, tag = 'scoped memory for tpu_custom_call.1']
    #allocation4 [shape = 's32[1]{0}', space=sflag, size = 0x4, scoped, tag = 'scoped memory for tpu_custom_call.1']
    #allocation5 [shape = 'u8[65536]{0}', space=vmem, size = 0x10000, scoped, tag = 'input window, operand 1, single buffered']
    #allocation6 [shape = 's32[1]{0}', space=sflag, size = 0x4, scoped, tag = 'scoped memory for tpu_custom_call.1']
    #allocation7 [shape = 'u8[32768]{0}', space=vmem, size = 0x8000, scoped, tag = 'input window, operand 3, single buffered']
    #allocation8 [shape = 'u8[8192]{0}', space=vmem, size = 0x2000, scoped, tag = 'output window, operand 0, single buffered']
    %10 = vsyncpa [#allocation3], 0
    %11 = vsyncpa [#allocation6], 0
    %12 = vsyncpa [#allocation4], 0
    // Predicated region
    $region2: #{tpu_custom_call.1} parent=1 // pred_check
      _
    $region3: #{tpu_custom_call.1} parent=1 // pred_check_branch
      %14 = sbr.rel (0) target = $region5
    $region4: #{tpu_custom_call.1} parent=1 // pred_region
      %s16 = ssub.s32 512, 512
      %17 = vsyncadd [#allocation3], %s16
      %s18 = sshll.u32 [#allocation2], 4
      %s19 = int_to_ptr.vmem [resolvable:$true] %s18
      %24 = dma.hbm_to_vmem [thread:$0]  %s0, 512, %s19, [#allocation3], 256, 256, 16
    $region5: #{tpu_custom_call.1} parent=1 // pred_fallthru
      _
    // Predicated region
    $region6: #{tpu_custom_call.1} parent=1 // pred_check
      _
    $region7: #{tpu_custom_call.1} parent=1 // pred_check_branch
      %26 = sbr.rel (0) target = $region9
    $region8: #{tpu_custom_call.1} parent=1 // pred_region
      %s28 = ssub.s32 2048, 2048
      %29 = vsyncadd [#allocation6], %s28
      %s30 = sshll.u32 [#allocation5], 4
      %s31 = int_to_ptr.vmem [resolvable:$true] %s30
      %36 = dma.hbm_to_vmem [thread:$0]  %s1, 2048, %s31, [#allocation6], 64, 64, 4
    $region9: #{tpu_custom_call.1} parent=1 // pred_fallthru
      _
    // Predicated region
    $region10: #{tpu_custom_call.1} parent=1 // pred_check
      _
    $region11: #{tpu_custom_call.1} parent=1 // pred_check_branch
      %38 = sbr.rel (0) target = $region13
    $region12: #{tpu_custom_call.1} parent=1 // pred_region
      _
    $region13: #{tpu_custom_call.1} parent=1 // pred_fallthru
      _
    // Predicated region
    $region14: #{tpu_custom_call.1} parent=1 // pred_check
      _
    $region15: #{tpu_custom_call.1} parent=1 // pred_check_branch
      %40 = sbr.rel (0) target = $region17
    $region16: #{tpu_custom_call.1} parent=1 // pred_region
      %s42 = ssub.s32 1024, 1024
      %43 = vsyncadd [#allocation6], %s42
      %s44 = sshll.u32 [#allocation7], 4
      %s45 = int_to_ptr.vmem [resolvable:$true] %s44
      %50 = dma.hbm_to_vmem [thread:$0]  %s3, 1024, %s45, [#allocation6], 64, 64, 4
    $region17: #{tpu_custom_call.1} parent=1 // pred_fallthru
      _
    // Predicated region
    $region18: #{tpu_custom_call.1} parent=1 // pred_check
      _
    $region19: #{tpu_custom_call.1} parent=1 // pred_check_branch
      %52 = sbr.rel (0) target = $region21
    $region20: #{tpu_custom_call.1} parent=1 // pred_region
      _
    $region21: #{tpu_custom_call.1} parent=1 // pred_fallthru
      _
    // Predicated region
    $region22: #{tpu_custom_call.1} parent=1 // pred_check
      _
    $region23: #{tpu_custom_call.1} parent=1 // pred_check_branch
      %54 = sbr.rel (0) target = $region25
    $region24: #{tpu_custom_call.1} parent=1 // pred_region
      %55 = dma.done [#allocation3], 512
    $region25: #{tpu_custom_call.1} parent=1 // pred_fallthru
      _
    // Predicated region
    $region26: #{tpu_custom_call.1} parent=1 // pred_check
      _
    $region27: #{tpu_custom_call.1} parent=1 // pred_check_branch
      %57 = sbr.rel (0) target = $region29
    $region28: #{tpu_custom_call.1} parent=1 // pred_region
      %58 = dma.done [#allocation6], 2048
    $region29: #{tpu_custom_call.1} parent=1 // pred_fallthru
      _
    // Predicated region
    $region30: #{tpu_custom_call.1} parent=1 // pred_check
      _
    $region31: #{tpu_custom_call.1} parent=1 // pred_check_branch
      %60 = sbr.rel (0) target = $region33
    $region32: #{tpu_custom_call.1} parent=1 // pred_region
      %61 = dma.done [#allocation6], 1024
    $region33: #{tpu_custom_call.1} parent=1 // pred_fallthru
      _
    %v63 = vld [vmem:[#allocation2] sm:$0xff]
    %v64 = vld [vmem:[#allocation2 + $0x8] sm:$0xff]
    %v65 = vld [vmem:[#allocation2 + $0x10] sm:$0xff]
    %v66 = vld [vmem:[#allocation2 + $0x18] sm:$0xff]
    %v67 = vpack.c.bf16 %v65, %v63
    %v68 = vpack.c.bf16 %v66, %v64
    %v69 = vld [vmem:[#allocation5] sm:$0xf]
    %v70 = vld [vmem:[#allocation5 + $0x4] sm:$0xf]
    %v71 = vld [vmem:[#allocation5 + $0x8] sm:$0xf]
    %v72 = vld [vmem:[#allocation5 + $0xc] sm:$0xf]
    %v73 = vld [vmem:[#allocation5 + $0x10] sm:$0xf]
    %v74 = vld [vmem:[#allocation5 + $0x14] sm:$0xf]
    %v75 = vld [vmem:[#allocation5 + $0x18] sm:$0xf]
    %v76 = vld [vmem:[#allocation5 + $0x1c] sm:$0xf]
    %v77 = vld [vmem:[#allocation5 + $0x20] sm:$0xf]
    %v78 = vld [vmem:[#allocation5 + $0x24] sm:$0xf]
    %v79 = vld [vmem:[#allocation5 + $0x28] sm:$0xf]
    %v80 = vld [vmem:[#allocation5 + $0x2c] sm:$0xf]
    %v81 = vld [vmem:[#allocation5 + $0x30] sm:$0xf]
    %v82 = vld [vmem:[#allocation5 + $0x34] sm:$0xf]
    %v83 = vld [vmem:[#allocation5 + $0x38] sm:$0xf]
    %v84 = vld [vmem:[#allocation5 + $0x3c] sm:$0xf]
    %v85 = vld [vmem:[#allocation5 + $0x40] sm:$0xf]
    %v86 = vld [vmem:[#allocation5 + $0x44] sm:$0xf]
    %v87 = vld [vmem:[#allocation5 + $0x48] sm:$0xf]
    %v88 = vld [vmem:[#allocation5 + $0x4c] sm:$0xf]
    %v89 = vld [vmem:[#allocation5 + $0x50] sm:$0xf]
    %v90 = vld [vmem:[#allocation5 + $0x54] sm:$0xf]
    %v91 = vld [vmem:[#allocation5 + $0x58] sm:$0xf]
    %v92 = vld [vmem:[#allocation5 + $0x5c] sm:$0xf]
    %v93 = vld [vmem:[#allocation5 + $0x60] sm:$0xf]
    %v94 = vld [vmem:[#allocation5 + $0x64] sm:$0xf]
    %v95 = vld [vmem:[#allocation5 + $0x68] sm:$0xf]
    %v96 = vld [vmem:[#allocation5 + $0x6c] sm:$0xf]
    %v97 = vld [vmem:[#allocation5 + $0x70] sm:$0xf]
    %v98 = vld [vmem:[#allocation5 + $0x74] sm:$0xf]
    %v99 = vld [vmem:[#allocation5 + $0x78] sm:$0xf]
    %v100 = vld [vmem:[#allocation5 + $0x7c] sm:$0xf]
    %v101 = vld [vmem:[%s2] sm:$0x1]
    %v103 = vlaneseq
    %v104 = vshrl.u32 %v103, 7
    %v105 = vsub.s32 0, %v104
    %v106 = vrot.slane %v101, %v105
    %v140 = vunpack.c.l.b16 %v69
    %v141 = vunpack.c.l.b16 %v70
    %v142 = vunpack.c.l.b16 %v71
    %v143 = vunpack.c.l.b16 %v72
    %v144 = vunpack.c.l.b16 %v73
    %v145 = vunpack.c.l.b16 %v74
    %v146 = vunpack.c.l.b16 %v75
    %v147 = vunpack.c.l.b16 %v76
    %v148 = vunpack.c.l.b16 %v77
    %v149 = vunpack.c.l.b16 %v78
    %v150 = vunpack.c.l.b16 %v79
    %v151 = vunpack.c.l.b16 %v80
    %v152 = vunpack.c.l.b16 %v81
    %v153 = vunpack.c.l.b16 %v82
    %v154 = vunpack.c.l.b16 %v83
    %v155 = vunpack.c.l.b16 %v84
    %v156 = vunpack.c.l.b16 %v85
    %v157 = vunpack.c.l.b16 %v86
    %v158 = vunpack.c.l.b16 %v87
    %v159 = vunpack.c.l.b16 %v88
    %v160 = vunpack.c.l.b16 %v89
    %v161 = vunpack.c.l.b16 %v90
    %v162 = vunpack.c.l.b16 %v91
    %v163 = vunpack.c.l.b16 %v92
    %v164 = vunpack.c.l.b16 %v93
    %v165 = vunpack.c.l.b16 %v94
    %v166 = vunpack.c.l.b16 %v95
    %v167 = vunpack.c.l.b16 %v96
    %v168 = vunpack.c.l.b16 %v97
    %v169 = vunpack.c.l.b16 %v98
    %v170 = vunpack.c.l.b16 %v99
    %v171 = vunpack.c.l.b16 %v100
    %v172 = vpack.c.b16 %v141, %v140
    %v173 = vpack.c.b16 %v143, %v142
    %v174 = vpack.c.b16 %v145, %v144
    %v175 = vpack.c.b16 %v147, %v146
    %v176 = vpack.c.b16 %v149, %v148
    %v177 = vpack.c.b16 %v151, %v150
    %v178 = vpack.c.b16 %v153, %v152
    %v179 = vpack.c.b16 %v155, %v154
    %v180 = vpack.c.b16 %v157, %v156
    %v181 = vpack.c.b16 %v159, %v158
    %v182 = vpack.c.b16 %v161, %v160
    %v183 = vpack.c.b16 %v163, %v162
    %v184 = vpack.c.b16 %v165, %v164
    %v185 = vpack.c.b16 %v167, %v166
    %v186 = vpack.c.b16 %v169, %v168
    %v187 = vpack.c.b16 %v171, %v170
    %204 = vmatprep.subr.bf16.mxu0 0
    %205 = vmatpush1.bf16.msra.mxu0 %v172
    %206 = vmatprep.subr.bf16.mxu0 0
    %207 = vmatpush1.bf16.msra.mxu0 %v173
    %208 = vmatprep.subr.bf16.mxu0 0
    %209 = vmatpush1.bf16.msra.mxu0 %v174
    %210 = vmatprep.subr.bf16.mxu0 0
    %211 = vmatpush1.bf16.msra.mxu0 %v175
    %212 = vmatprep.subr.bf16.mxu0 0
    %213 = vmatpush1.bf16.msra.mxu0 %v176
    %214 = vmatprep.subr.bf16.mxu0 0
    %215 = vmatpush1.bf16.msra.mxu0 %v177
    %216 = vmatprep.subr.bf16.mxu0 0
    %217 = vmatpush1.bf16.msra.mxu0 %v178
    %218 = vmatprep.subr.bf16.mxu0 0
    %219 = vmatpush1.bf16.msra.mxu0 %v179
    %220 = vmatprep.subr.bf16.mxu0 0
    %221 = vmatpush1.bf16.msra.mxu0 %v180
    %222 = vmatprep.subr.bf16.mxu0 0
    %223 = vmatpush1.bf16.msra.mxu0 %v181
    %224 = vmatprep.subr.bf16.mxu0 0
    %225 = vmatpush1.bf16.msra.mxu0 %v182
    %226 = vmatprep.subr.bf16.mxu0 0
    %227 = vmatpush1.bf16.msra.mxu0 %v183
    %228 = vmatprep.subr.bf16.mxu0 0
    %229 = vmatpush1.bf16.msra.mxu0 %v184
    %230 = vmatprep.subr.bf16.mxu0 0
    %231 = vmatpush1.bf16.msra.mxu0 %v185
    %232 = vmatprep.subr.bf16.mxu0 0
    %233 = vmatpush1.bf16.msra.mxu0 %v186
    %234 = vmatprep.subr.bf16.mxu0 0
    %235 = vmatpush1.bf16.msra.mxu0 %v187
    %236 = vmatprep.mubr.bf16.mxu0 %v68
    %237 = vmatmul.mubr.bf16.gmra.mrb[0].mxu0 %v67
    %v238 = vpop.f32.mrb[0].mxu0
    %v239 = vadd.f32 %v106, %v238
    %v240 = vpop.f32.mrb[0].mxu0
    %v241 = vpop.f32.mrb[0].mxu0
    %v242 = vadd.f32 %v106, %v241
    %v243 = vpop.f32.mrb[0].mxu0
    %244 = vdwg.mxu0
    %v245 = vmul.f32 %v239, 0.5
    %v246 = vmul.f32 %v242, 0.5
    %v247 = vmul.f32 %v239, 0.70710677
    %v248 = vmul.f32 %v242, 0.70710677
    %v249 = verf.f32.pop %v247
    %v250 = verf.f32.pop %v248
    %v251 = vadd.f32 %v249, 1.0
    %v252 = vadd.f32 %v250, 1.0
    %v253 = vmul.f32 %v245, %v251
    %v254 = vmul.f32 %v246, %v252
    %v255 = vpack.c.bf16 %v254, %v253
    %v256 = vld [vmem:[#allocation7] sm:$0xf]
    %v257 = vld [vmem:[#allocation7 + $0x4] sm:$0xf]
    %v258 = vld [vmem:[#allocation7 + $0x8] sm:$0xf]
    %v259 = vld [vmem:[#allocation7 + $0xc] sm:$0xf]
    %v260 = vld [vmem:[#allocation7 + $0x10] sm:$0xf]
    %v261 = vld [vmem:[#allocation7 + $0x14] sm:$0xf]
    %v262 = vld [vmem:[#allocation7 + $0x18] sm:$0xf]
    %v263 = vld [vmem:[#allocation7 + $0x1c] sm:$0xf]
    %v264 = vld [vmem:[#allocation7 + $0x20] sm:$0xf]
    %v265 = vld [vmem:[#allocation7 + $0x24] sm:$0xf]
    %v266 = vld [vmem:[#allocation7 + $0x28] sm:$0xf]
    %v267 = vld [vmem:[#allocation7 + $0x2c] sm:$0xf]
    %v268 = vld [vmem:[#allocation7 + $0x30] sm:$0xf]
    %v269 = vld [vmem:[#allocation7 + $0x34] sm:$0xf]
    %v270 = vld [vmem:[#allocation7 + $0x38] sm:$0xf]
    %v271 = vld [vmem:[#allocation7 + $0x3c] sm:$0xf]
    %v272 = vld [vmem:[%s4] sm:$0x1]
    %v274 = vlaneseq
    %v275 = vshrl.u32 %v274, 7
    %v276 = vsub.s32 0, %v275
    %v277 = vrot.slane %v272, %v276
    %v295 = vunpack.c.l.b16 %v256
    %v296 = vunpack.c.l.b16 %v257
    %v297 = vunpack.c.l.b16 %v258
    %v298 = vunpack.c.l.b16 %v259
    %v299 = vunpack.c.l.b16 %v260
    %v300 = vunpack.c.l.b16 %v261
    %v301 = vunpack.c.l.b16 %v262
    %v302 = vunpack.c.l.b16 %v263
    %v303 = vunpack.c.l.b16 %v264
    %v304 = vunpack.c.l.b16 %v265
    %v305 = vunpack.c.l.b16 %v266
    %v306 = vunpack.c.l.b16 %v267
    %v307 = vunpack.c.l.b16 %v268
    %v308 = vunpack.c.l.b16 %v269
    %v309 = vunpack.c.l.b16 %v270
    %v310 = vunpack.c.l.b16 %v271
    %v311 = vpack.c.b16 %v296, %v295
    %v312 = vpack.c.b16 %v298, %v297
    %v313 = vpack.c.b16 %v300, %v299
    %v314 = vpack.c.b16 %v302, %v301
    %v315 = vpack.c.b16 %v304, %v303
    %v316 = vpack.c.b16 %v306, %v305
    %v317 = vpack.c.b16 %v308, %v307
    %v318 = vpack.c.b16 %v310, %v309
    %327 = vmatprep.subr.bf16.mxu0 0
    %328 = vmatpush1.bf16.msra.mxu0 %v311
    %329 = vmatprep.subr.bf16.mxu0 0
    %330 = vmatpush1.bf16.msra.mxu0 %v312
    %331 = vmatprep.subr.bf16.mxu0 0
    %332 = vmatpush1.bf16.msra.mxu0 %v313
    %333 = vmatprep.subr.bf16.mxu0 0
    %334 = vmatpush1.bf16.msra.mxu0 %v314
    %335 = vmatprep.subr.bf16.mxu0 0
    %336 = vmatpush1.bf16.msra.mxu0 %v315
    %337 = vmatprep.subr.bf16.mxu0 0
    %338 = vmatpush1.bf16.msra.mxu0 %v316
    %339 = vmatprep.subr.bf16.mxu0 0
    %340 = vmatpush1.bf16.msra.mxu0 %v317
    %341 = vmatprep.subr.bf16.mxu0 0
    %342 = vmatpush1.bf16.msra.mxu0 %v318
    %343 = vmatprep.subr.bf16.mxu0 0
    %344 = vmatpush1.bf16.msra.mxu0 0
    %345 = vmatprep.subr.bf16.mxu0 0
    %346 = vmatpush1.bf16.msra.mxu0 0
    %347 = vmatprep.subr.bf16.mxu0 0
    %348 = vmatpush1.bf16.msra.mxu0 0
    %349 = vmatprep.subr.bf16.mxu0 0
    %350 = vmatpush1.bf16.msra.mxu0 0
    %351 = vmatprep.subr.bf16.mxu0 0
    %352 = vmatpush1.bf16.msra.mxu0 0
    %353 = vmatprep.subr.bf16.mxu0 0
    %354 = vmatpush1.bf16.msra.mxu0 0
    %355 = vmatprep.subr.bf16.mxu0 0
    %356 = vmatpush1.bf16.msra.mxu0 0
    %357 = vmatprep.subr.bf16.mxu0 0
    %358 = vmatpush1.bf16.msra.mxu0 0
    %359 = vmatprep.mubr.bf16.mxu0 0
    %360 = vmatmul.mubr.bf16.gmra.mrb[0].mxu0 %v255
    %v361 = vpop.f32.mrb[0].mxu0
    %v362 = vadd.f32 %v277, %v361
    %v363 = vpop.f32.mrb[0].mxu0
    %v364 = vpop.f32.mrb[0].mxu0
    %v365 = vadd.f32 %v277, %v364
    %v366 = vpop.f32.mrb[0].mxu0
    %367 = vdwg.mxu0
    %368 = vst [vmem:[#allocation8] sm:$0xff] %v362
    %369 = vst [vmem:[#allocation8 + $0x8] sm:$0xff] %v365
    // Predicated region
    $region34: #{tpu_custom_call.1} parent=1 // pred_check
      _
    $region35: #{tpu_custom_call.1} parent=1 // pred_check_branch
      %371 = sbr.rel (0) target = $region37
    $region36: #{tpu_custom_call.1} parent=1 // pred_region
      %s373 = ssub.s32 256, 256
      %374 = vsyncadd [#allocation4], %s373
      %s375 = sshll.u32 [#allocation8], 4
      %s376 = int_to_ptr.vmem [resolvable:$true] %s375
      %381 = dma.vmem_to_hbm [thread:$0]  %s376, 256, %s5, [#allocation4], 128, 128, 8
    $region37: #{tpu_custom_call.1} parent=1 // pred_fallthru
      _
    // Predicated region
    $region38: #{tpu_custom_call.1} parent=1 // pred_check
      _
    $region39: #{tpu_custom_call.1} parent=1 // pred_check_branch
      %383 = sbr.rel (0) target = $region41
    $region40: #{tpu_custom_call.1} parent=1 // pred_region
      %384 = dma.done [#allocation4], 256
    $region41: #{tpu_custom_call.1} parent=1 // pred_fallthru
      _
    %385 = vsyncpa [#allocation3], 1
    %386 = vsyncpa [#allocation6], 1
    %387 = vsyncpa [#allocation4], 1

// kernel: tpu_custom_call.1
$region0: #{tpu_custom_call.1}
  #allocation0 [shape = 'u32[]', space=smem, size = 0x4, offset = 0x4, fixed_abs, tag = 'smem constant byte address 0x4 - core index']
  #allocation1 [shape = 'u32[144,128]{1,0:T(1,128)}', space=vmem, size = 0x12000, scoped, tag = 'internal scratch']
  %s0 = inlined_call_operand.hbm [shape: f32[16,256], index: 0, kind: input, shape index: {}]
  %s1 = inlined_call_operand.hbm [shape: bf16[256,128], index: 1, kind: input, shape index: {}]
  %s2 = inlined_call_operand.vmem [shape: f32[1,128], index: 2, kind: input, shape index: {}]
  %s3 = inlined_call_operand.hbm [shape: bf16[128,128], index: 3, kind: input, shape index: {}]
  %s4 = inlined_call_operand.vmem [shape: f32[1,128], index: 4, kind: input, shape index: {}]
  %s5 = inlined_call_operand.hbm [shape: f32[16,128], index: 5, kind: output, shape index: {}]
  %s6 = sld [smem:[#allocation0]]
  $region42: #{tpu_custom_call.1} parent=0
    _
  %s8 = ssub.s32 1, %s6
  %s9 = scalar_select 0, %s8, %s6
  $region1: #{tpu_custom_call.1} parent=0
    #allocation2 [shape = 'u8[16384]{0}', space=vmem, size = 0x4000, scoped, tag = 'input window, operand 0, single buffered']
    #allocation3 [shape = 's32[1]{0}', space=sflag, size = 0x4, scoped, tag = 'scoped memory for tpu_custom_call.1']
    #allocation4 [shape = 's32[1]{0}', space=sflag, size = 0x4, scoped, tag = 'scoped memory for tpu_custom_call.1']
    #allocation5 [shape = 'u8[65536]{0}', space=vmem, size = 0x10000, scoped, tag = 'input window, operand 1, single buffered']
    #allocation6 [shape = 's32[1]{0}', space=sflag, size = 0x4, scoped, tag = 'scoped memory for tpu_custom_call.1']
    #allocation7 [shape = 'u8[32768]{0}', space=vmem, size = 0x8000, scoped, tag = 'input window, operand 3, single buffered']
    #allocation8 [shape = 'u8[8192]{0}', space=vmem, size = 0x2000, scoped, tag = 'output window, operand 0, single buffered']
    %10 = vsyncpa [#allocation3], 0
    %11 = vsyncpa [#allocation6], 0
    %12 = vsyncpa [#allocation4], 0
    // Predicated region
    $region2: #{tpu_custom_call.1} parent=1 // pred_check
      _
    $region3: #{tpu_custom_call.1} parent=1 // pred_check_branch
      %14 = sbr.rel (0) target = $region5
    $region4: #{tpu_custom_call.1} parent=1 // pred_region
      %s16 = ssub.s32 512, 512
      %17 = vsyncadd [#allocation3], %s16
      %s18 = sshll.u32 [#allocation2], 4
      %s19 = int_to_ptr.vmem [resolvable:$true] %s18
      %24 = dma.hbm_to_vmem [thread:$0]  %s0, 512, %s19, [#allocation3], 256, 256, 16
    $region5: #{tpu_custom_call.1} parent=1 // pred_fallthru
      _
    // Predicated region
    $region6: #{tpu_custom_call.1} parent=1 // pred_check
      _
    $region7: #{tpu_custom_call.1} parent=1 // pred_check_branch
      %26 = sbr.rel (0) target = $region9
    $region8: #{tpu_custom_call.1} parent=1 // pred_region
      %s28 = ssub.s32 2048, 2048
      %29 = vsyncadd [#allocation6], %s28
      %s30 = sshll.u32 [#allocation5], 4
      %s31 = int_to_ptr.vmem [resolvable:$true] %s30
      %36 = dma.hbm_to_vmem [thread:$0]  %s1, 2048, %s31, [#allocation6], 64, 64, 4
    $region9: #{tpu_custom_call.1} parent=1 // pred_fallthru
      _
    // Predicated region
    $region10: #{tpu_custom_call.1} parent=1 // pred_check
      _
    $region11: #{tpu_custom_call.1} parent=1 // pred_check_branch
      %38 = sbr.rel (0) target = $region13
    $region12: #{tpu_custom_call.1} parent=1 // pred_region
      _
    $region13: #{tpu_custom_call.1} parent=1 // pred_fallthru
      _
    // Predicated region
    $region14: #{tpu_custom_call.1} parent=1 // pred_check
      _
    $region15: #{tpu_custom_call.1} parent=1 // pred_check_branch
      %40 = sbr.rel (0) target = $region17
    $region16: #{tpu_custom_call.1} parent=1 // pred_region
      %s42 = ssub.s32 1024, 1024
      %43 = vsyncadd [#allocation6], %s42
      %s44 = sshll.u32 [#allocation7], 4
      %s45 = int_to_ptr.vmem [resolvable:$true] %s44
      %50 = dma.hbm_to_vmem [thread:$0]  %s3, 1024, %s45, [#allocation6], 64, 64, 4
    $region17: #{tpu_custom_call.1} parent=1 // pred_fallthru
      _
    // Predicated region
    $region18: #{tpu_custom_call.1} parent=1 // pred_check
      _
    $region19: #{tpu_custom_call.1} parent=1 // pred_check_branch
      %52 = sbr.rel (0) target = $region21
    $region20: #{tpu_custom_call.1} parent=1 // pred_region
      _
    $region21: #{tpu_custom_call.1} parent=1 // pred_fallthru
      _
    // Predicated region
    $region22: #{tpu_custom_call.1} parent=1 // pred_check
      _
    $region23: #{tpu_custom_call.1} parent=1 // pred_check_branch
      %54 = sbr.rel (0) target = $region25
    $region24: #{tpu_custom_call.1} parent=1 // pred_region
      %55 = dma.done [#allocation3], 512
    $region25: #{tpu_custom_call.1} parent=1 // pred_fallthru
      _
    // Predicated region
    $region26: #{tpu_custom_call.1} parent=1 // pred_check
      _
    $region27: #{tpu_custom_call.1} parent=1 // pred_check_branch
      %57 = sbr.rel (0) target = $region29
    $region28: #{tpu_custom_call.1} parent=1 // pred_region
      %58 = dma.done [#allocation6], 2048
    $region29: #{tpu_custom_call.1} parent=1 // pred_fallthru
      _
    // Predicated region
    $region30: #{tpu_custom_call.1} parent=1 // pred_check
      _
    $region31: #{tpu_custom_call.1} parent=1 // pred_check_branch
      %60 = sbr.rel (0) target = $region33
    $region32: #{tpu_custom_call.1} parent=1 // pred_region
      %61 = dma.done [#allocation6], 1024
    $region33: #{tpu_custom_call.1} parent=1 // pred_fallthru
      _
    %v63 = vld [vmem:[#allocation2] sm:$0xff]
    %v64 = vld [vmem:[#allocation2 + $0x8] sm:$0xff]
    %v65 = vld [vmem:[#allocation2 + $0x10] sm:$0xff]
    %v66 = vld [vmem:[#allocation2 + $0x18] sm:$0xff]
    %v67 = vpack.c.bf16 %v65, %v63
    %v68 = vpack.c.bf16 %v66, %v64
    %v69 = vld [vmem:[#allocation5] sm:$0xf]
    %v70 = vld [vmem:[#allocation5 + $0x4] sm:$0xf]
    %v71 = vld [vmem:[#allocation5 + $0x8] sm:$0xf]
    %v72 = vld [vmem:[#allocation5 + $0xc] sm:$0xf]
    %v73 = vld [vmem:[#allocation5 + $0x10] sm:$0xf]
    %v74 = vld [vmem:[#allocation5 + $0x14] sm:$0xf]
    %v75 = vld [vmem:[#allocation5 + $0x18] sm:$0xf]
    %v76 = vld [vmem:[#allocation5 + $0x1c] sm:$0xf]
    %v77 = vld [vmem:[#allocation5 + $0x20] sm:$0xf]
    %v78 = vld [vmem:[#allocation5 + $0x24] sm:$0xf]
    %v79 = vld [vmem:[#allocation5 + $0x28] sm:$0xf]
    %v80 = vld [vmem:[#allocation5 + $0x2c] sm:$0xf]
    %v81 = vld [vmem:[#allocation5 + $0x30] sm:$0xf]
    %v82 = vld [vmem:[#allocation5 + $0x34] sm:$0xf]
    %v83 = vld [vmem:[#allocation5 + $0x38] sm:$0xf]
    %v84 = vld [vmem:[#allocation5 + $0x3c] sm:$0xf]
    %v85 = vld [vmem:[#allocation5 + $0x40] sm:$0xf]
    %v86 = vld [vmem:[#allocation5 + $0x44] sm:$0xf]
    %v87 = vld [vmem:[#allocation5 + $0x48] sm:$0xf]
    %v88 = vld [vmem:[#allocation5 + $0x4c] sm:$0xf]
    %v89 = vld [vmem:[#allocation5 + $0x50] sm:$0xf]
    %v90 = vld [vmem:[#allocation5 + $0x54] sm:$0xf]
    %v91 = vld [vmem:[#allocation5 + $0x58] sm:$0xf]
    %v92 = vld [vmem:[#allocation5 + $0x5c] sm:$0xf]
    %v93 = vld [vmem:[#allocation5 + $0x60] sm:$0xf]
    %v94 = vld [vmem:[#allocation5 + $0x64] sm:$0xf]
    %v95 = vld [vmem:[#allocation5 + $0x68] sm:$0xf]
    %v96 = vld [vmem:[#allocation5 + $0x6c] sm:$0xf]
    %v97 = vld [vmem:[#allocation5 + $0x70] sm:$0xf]
    %v98 = vld [vmem:[#allocation5 + $0x74] sm:$0xf]
    %v99 = vld [vmem:[#allocation5 + $0x78] sm:$0xf]
    %v100 = vld [vmem:[#allocation5 + $0x7c] sm:$0xf]
    %v101 = vld [vmem:[%s2] sm:$0x1]
    %v103 = vlaneseq
    %v104 = vshrl.u32 %v103, 7
    %v105 = vsub.s32 0, %v104
    %v106 = vrot.slane %v101, %v105
    %v140 = vunpack.c.l.b16 %v69
    %v141 = vunpack.c.l.b16 %v70
    %v142 = vunpack.c.l.b16 %v71
    %v143 = vunpack.c.l.b16 %v72
    %v144 = vunpack.c.l.b16 %v73
    %v145 = vunpack.c.l.b16 %v74
    %v146 = vunpack.c.l.b16 %v75
    %v147 = vunpack.c.l.b16 %v76
    %v148 = vunpack.c.l.b16 %v77
    %v149 = vunpack.c.l.b16 %v78
    %v150 = vunpack.c.l.b16 %v79
    %v151 = vunpack.c.l.b16 %v80
    %v152 = vunpack.c.l.b16 %v81
    %v153 = vunpack.c.l.b16 %v82
    %v154 = vunpack.c.l.b16 %v83
    %v155 = vunpack.c.l.b16 %v84
    %v156 = vunpack.c.l.b16 %v85
    %v157 = vunpack.c.l.b16 %v86
    %v158 = vunpack.c.l.b16 %v87
    %v159 = vunpack.c.l.b16 %v88
    %v160 = vunpack.c.l.b16 %v89
    %v161 = vunpack.c.l.b16 %v90
    %v162 = vunpack.c.l.b16 %v91
    %v163 = vunpack.c.l.b16 %v92
    %v164 = vunpack.c.l.b16 %v93
    %v165 = vunpack.c.l.b16 %v94
    %v166 = vunpack.c.l.b16 %v95
    %v167 = vunpack.c.l.b16 %v96
    %v168 = vunpack.c.l.b16 %v97
    %v169 = vunpack.c.l.b16 %v98
    %v170 = vunpack.c.l.b16 %v99
    %v171 = vunpack.c.l.b16 %v100
    %v172 = vpack.c.b16 %v141, %v140
    %v173 = vpack.c.b16 %v143, %v142
    %v174 = vpack.c.b16 %v145, %v144
    %v175 = vpack.c.b16 %v147, %v146
    %v176 = vpack.c.b16 %v149, %v148
    %v177 = vpack.c.b16 %v151, %v150
    %v178 = vpack.c.b16 %v153, %v152
    %v179 = vpack.c.b16 %v155, %v154
    %v180 = vpack.c.b16 %v157, %v156
    %v181 = vpack.c.b16 %v159, %v158
    %v182 = vpack.c.b16 %v161, %v160
    %v183 = vpack.c.b16 %v163, %v162
    %v184 = vpack.c.b16 %v165, %v164
    %v185 = vpack.c.b16 %v167, %v166
    %v186 = vpack.c.b16 %v169, %v168
    %v187 = vpack.c.b16 %v171, %v170
    %204 = vmatprep.subr.bf16.mxu0 0
    %205 = vmatpush1.bf16.msra.mxu0 %v172
    %206 = vmatprep.subr.bf16.mxu0 0
    %207 = vmatpush1.bf16.msra.mxu0 %v173
    %208 = vmatprep.subr.bf16.mxu0 0
    %209 = vmatpush1.bf16.msra.mxu0 %v174
    %210 = vmatprep.subr.bf16.mxu0 0
    %211 = vmatpush1.bf16.msra.mxu0 %v175
    %212 = vmatprep.subr.bf16.mxu0 0
    %213 = vmatpush1.bf16.msra.mxu0 %v176
    %214 = vmatprep.subr.bf16.mxu0 0
    %215 = vmatpush1.bf16.msra.mxu0 %v177
    %216 = vmatprep.subr.bf16.mxu0 0
    %217 = vmatpush1.bf16.msra.mxu0 %v178
    %218 = vmatprep.subr.bf16.mxu0 0
    %219 = vmatpush1.bf16.msra.mxu0 %v179
    %220 = vmatprep.subr.bf16.mxu0 0
    %221 = vmatpush1.bf16.msra.mxu0 %v180
    %222 = vmatprep.subr.bf16.mxu0 0
    %223 = vmatpush1.bf16.msra.mxu0 %v181
    %224 = vmatprep.subr.bf16.mxu0 0
    %225 = vmatpush1.bf16.msra.mxu0 %v182
    %226 = vmatprep.subr.bf16.mxu0 0
    %227 = vmatpush1.bf16.msra.mxu0 %v183
    %228 = vmatprep.subr.bf16.mxu0 0
    %229 = vmatpush1.bf16.msra.mxu0 %v184
    %230 = vmatprep.subr.bf16.mxu0 0
    %231 = vmatpush1.bf16.msra.mxu0 %v185
    %232 = vmatprep.subr.bf16.mxu0 0
    %233 = vmatpush1.bf16.msra.mxu0 %v186
    %234 = vmatprep.subr.bf16.mxu0 0
    %235 = vmatpush1.bf16.msra.mxu0 %v187
    %236 = vmatprep.mubr.bf16.mxu0 %v68
    %237 = vmatmul.mubr.bf16.gmra.mrb[0].mxu0 %v67
    %v238 = vpop.f32.mrb[0].mxu0
    %v239 = vadd.f32 %v106, %v238
    %v240 = vpop.f32.mrb[0].mxu0
    %v241 = vpop.f32.mrb[0].mxu0
    %v242 = vadd.f32 %v106, %v241
    %v243 = vpop.f32.mrb[0].mxu0
    %244 = vdwg.mxu0
    %v245 = vmul.f32 %v239, 0.5
    %v246 = vmul.f32 %v242, 0.5
    %v247 = vmul.f32 %v239, 0.70710677
    %v248 = vmul.f32 %v242, 0.70710677
    %v249 = verf.f32.pop %v247
    %v250 = verf.f32.pop %v248
    %v251 = vadd.f32 %v249, 1.0
    %v252 = vadd.f32 %v250, 1.0
    %v253 = vmul.f32 %v245, %v251
    %v254 = vmul.f32 %v246, %v252
    %v255 = vpack.c.bf16 %v254, %v253
    %v256 = vld [vmem:[#allocation7] sm:$0xf]
    %v257 = vld [vmem:[#allocation7 + $0x4] sm:$0xf]
    %v258 = vld [vmem:[#allocation7 + $0x8] sm:$0xf]
    %v259 = vld [vmem:[#allocation7 + $0xc] sm:$0xf]
    %v260 = vld [vmem:[#allocation7 + $0x10] sm:$0xf]
    %v261 = vld [vmem:[#allocation7 + $0x14] sm:$0xf]
    %v262 = vld [vmem:[#allocation7 + $0x18] sm:$0xf]
    %v263 = vld [vmem:[#allocation7 + $0x1c] sm:$0xf]
    %v264 = vld [vmem:[#allocation7 + $0x20] sm:$0xf]
    %v265 = vld [vmem:[#allocation7 + $0x24] sm:$0xf]
    %v266 = vld [vmem:[#allocation7 + $0x28] sm:$0xf]
    %v267 = vld [vmem:[#allocation7 + $0x2c] sm:$0xf]
    %v268 = vld [vmem:[#allocation7 + $0x30] sm:$0xf]
    %v269 = vld [vmem:[#allocation7 + $0x34] sm:$0xf]
    %v270 = vld [vmem:[#allocation7 + $0x38] sm:$0xf]
    %v271 = vld [vmem:[#allocation7 + $0x3c] sm:$0xf]
    %v272 = vld [vmem:[%s4] sm:$0x1]
    %v274 = vlaneseq
    %v275 = vshrl.u32 %v274, 7
    %v276 = vsub.s32 0, %v275
    %v277 = vrot.slane %v272, %v276
    %v295 = vunpack.c.l.b16 %v256
    %v296 = vunpack.c.l.b16 %v257
    %v297 = vunpack.c.l.b16 %v258
    %v298 = vunpack.c.l.b16 %v259
    %v299 = vunpack.c.l.b16 %v260
    %v300 = vunpack.c.l.b16 %v261
    %v301 = vunpack.c.l.b16 %v262
    %v302 = vunpack.c.l.b16 %v263
    %v303 = vunpack.c.l.b16 %v264
    %v304 = vunpack.c.l.b16 %v265
    %v305 = vunpack.c.l.b16 %v266
    %v306 = vunpack.c.l.b16 %v267
    %v307 = vunpack.c.l.b16 %v268
    %v308 = vunpack.c.l.b16 %v269
    %v309 = vunpack.c.l.b16 %v270
    %v310 = vunpack.c.l.b16 %v271
    %v311 = vpack.c.b16 %v296, %v295
    %v312 = vpack.c.b16 %v298, %v297
    %v313 = vpack.c.b16 %v300, %v299
    %v314 = vpack.c.b16 %v302, %v301
    %v315 = vpack.c.b16 %v304, %v303
    %v316 = vpack.c.b16 %v306, %v305
    %v317 = vpack.c.b16 %v308, %v307
    %v318 = vpack.c.b16 %v310, %v309
    %327 = vmatprep.subr.bf16.mxu0 0
    %328 = vmatpush1.bf16.msra.mxu0 %v311
    %329 = vmatprep.subr.bf16.mxu0 0
    %330 = vmatpush1.bf16.msra.mxu0 %v312
    %331 = vmatprep.subr.bf16.mxu0 0
    %332 = vmatpush1.bf16.msra.mxu0 %v313
    %333 = vmatprep.subr.bf16.mxu0 0
    %334 = vmatpush1.bf16.msra.mxu0 %v314
    %335 = vmatprep.subr.bf16.mxu0 0
    %336 = vmatpush1.bf16.msra.mxu0 %v315
    %337 = vmatprep.subr.bf16.mxu0 0
    %338 = vmatpush1.bf16.msra.mxu0 %v316
    %339 = vmatprep.subr.bf16.mxu0 0
    %340 = vmatpush1.bf16.msra.mxu0 %v317
    %341 = vmatprep.subr.bf16.mxu0 0
    %342 = vmatpush1.bf16.msra.mxu0 %v318
    %343 = vmatprep.subr.bf16.mxu0 0
    %344 = vmatpush1.bf16.msra.mxu0 0
    %345 = vmatprep.subr.bf16.mxu0 0
    %346 = vmatpush1.bf16.msra.mxu0 0
    %347 = vmatprep.subr.bf16.mxu0 0
    %348 = vmatpush1.bf16.msra.mxu0 0
    %349 = vmatprep.subr.bf16.mxu0 0
    %350 = vmatpush1.bf16.msra.mxu0 0
    %351 = vmatprep.subr.bf16.mxu0 0
    %352 = vmatpush1.bf16.msra.mxu0 0
    %353 = vmatprep.subr.bf16.mxu0 0
    %354 = vmatpush1.bf16.msra.mxu0 0
    %355 = vmatprep.subr.bf16.mxu0 0
    %356 = vmatpush1.bf16.msra.mxu0 0
    %357 = vmatprep.subr.bf16.mxu0 0
    %358 = vmatpush1.bf16.msra.mxu0 0
    %359 = vmatprep.mubr.bf16.mxu0 0
    %360 = vmatmul.mubr.bf16.gmra.mrb[0].mxu0 %v255
    %v361 = vpop.f32.mrb[0].mxu0
    %v362 = vadd.f32 %v277, %v361
    %v363 = vpop.f32.mrb[0].mxu0
    %v364 = vpop.f32.mrb[0].mxu0
    %v365 = vadd.f32 %v277, %v364
    %v366 = vpop.f32.mrb[0].mxu0
    %367 = vdwg.mxu0
    %368 = vst [vmem:[#allocation8] sm:$0xff] %v362
    %369 = vst [vmem:[#allocation8 + $0x8] sm:$0xff] %v365
    // Predicated region
    $region34: #{tpu_custom_call.1} parent=1 // pred_check
      _
    $region35: #{tpu_custom_call.1} parent=1 // pred_check_branch
      %371 = sbr.rel (0) target = $region37
    $region36: #{tpu_custom_call.1} parent=1 // pred_region
      %s373 = ssub.s32 256, 256
      %374 = vsyncadd [#allocation4], %s373
      %s375 = sshll.u32 [#allocation8], 4
      %s376 = int_to_ptr.vmem [resolvable:$true] %s375
      %381 = dma.vmem_to_hbm [thread:$0]  %s376, 256, %s5, [#allocation4], 128, 128, 8
    $region37: #{tpu_custom_call.1} parent=1 // pred_fallthru
      _
    // Predicated region
    $region38: #{tpu_custom_call.1} parent=1 // pred_check
      _
    $region39: #{tpu_custom_call.1} parent=1 // pred_check_branch
      %383 = sbr.rel (0) target = $region41
    $region40: #{tpu_custom_call.1} parent=1 // pred_region
      %384 = dma.done [#allocation4], 256
    $region41: #{tpu_custom_call.1} parent=1 // pred_fallthru
      _
    %385 = vsyncpa [#allocation3], 1
    %386 = vsyncpa [#allocation6], 1
    %387 = vsyncpa [#allocation4], 1

</llo_original>
